<compile_context>
chip_gen: v7x
topology: tpu7x:2x2x1
jax: 0.10.0
libtpu: 0.0.40
codegen_flags: <defaults>
</compile_context>

<pallas_src>
import functools
import math

import jax
import jax.numpy as jnp
from jax.experimental import pallas as pl
from jax.experimental.pallas import tpu as pltpu

# ----------------------------- model config -------------------------------
IN_DIM = 4        # number of coordinates
OUT_DIM = 2       # output dim
N_LAYERS = 3      # number of DGM layers
N_NEURONS = 32    # hidden width
BATCH = 16


# ------------------------------- kernel -----------------------------------
def dgm_kernel(x_ref, xw_ref, xb_ref, w_ref, wout_ref, bout_ref, out_ref,
               *, n_layers, hidden):
    H = hidden
    x = x_ref[...]                                                 # [B, in_dim]

    # One lane-dense matmul covers the input layer AND every x-dependent gate
    # term of every DGM layer (x never changes across layers); biases folded in.
    xu = (jnp.dot(x, xw_ref[...], preferred_element_type=jnp.float32)
          + xb_ref[...])                                           # [B, H + L*3H]

    # Input layer: s = tanh(x @ W_in + b_in)
    s = jnp.tanh(xu[:, :H])                                        # [B, H]

    # DGM layers (statically unrolled); one fused matmul + one tanh per layer.
    for l in range(n_layers):
        off = H + l * 3 * H
        pre = xu[:, off:off + 3 * H] + jnp.dot(
            s, w_ref[l], preferred_element_type=jnp.float32)       # [B, 3H]
        gates = jnp.tanh(pre)
        z = gates[:, 0:H]
        g = gates[:, H:2 * H]
        h = gates[:, 2 * H:3 * H]
        # r gate of the reference module is dead compute -> dropped entirely
        s = (1.0 - g) * h + z * s

    # Output layer
    out_ref[...] = (
        jnp.dot(s, wout_ref[...], preferred_element_type=jnp.float32)
        + bout_ref[...]
    )


# --------------------------- weight packing --------------------------------
def _pack_params(params):
    """Pack per-gate weights into lane-dense slabs for the kernel."""
    w_in, b_in, u_all, w_all, b_all, w_out, b_out = params
    in_dim, H = w_in.shape
    L = u_all.shape[0]

    used = jnp.array([0, 1, 3])            # gates Z, G, H (R is dead)
    u_used = u_all[:, used, :, :]          # [L, 3, in_dim, H]
    w_used = w_all[:, used, :, :]          # [L, 3, H, H]
    b_used = b_all[:, used, :, :]          # [L, 3, 1, H]

    # [in_dim, L*3*H] column order: layer-major, gate (Z,G,H) within layer
    u_flat = jnp.transpose(u_used, (2, 0, 1, 3)).reshape(in_dim, L * 3 * H)
    xw_pack = jnp.concatenate([w_in, u_flat], axis=1)              # [in, H+L*3H]

    b_flat = jnp.transpose(b_used, (2, 0, 1, 3)).reshape(1, L * 3 * H)
    xb_pack = jnp.concatenate([b_in, b_flat], axis=1)              # [1, H+L*3H]

    w_pack = jnp.transpose(w_used, (0, 2, 1, 3)).reshape(L, H, 3 * H)

    return xw_pack, xb_pack, w_pack, w_out, b_out


# ------------------------------- wrapper -----------------------------------
def dgm_net_pallas(x, params):
    xw_pack, xb_pack, w_pack, w_out, b_out = _pack_params(params)
    B, in_dim = x.shape
    H = params[0].shape[1]
    out_dim = w_out.shape[1]
    L = w_pack.shape[0]
    cols = xw_pack.shape[1]

    kernel = functools.partial(dgm_kernel, n_layers=L, hidden=H)

    full = lambda shape: pl.BlockSpec(shape, lambda i: (0,) * len(shape))

    # Single grid step: whole batch resident in VMEM/vregs, one output store.
    return pl.pallas_call(
        kernel,
        out_shape=jax.ShapeDtypeStruct((B, out_dim), jnp.float32),
        grid=(1,),
        in_specs=[
            full((B, in_dim)),        # x
            full((in_dim, cols)),     # XW_pack (W_in | U gates)
            full((1, cols)),          # XB_pack (b_in | gate biases)
            full((L, H, 3 * H)),      # W_pack (hidden-state gate weights)
            full((H, out_dim)),       # W_out
            full((1, out_dim)),       # b_out
        ],
        out_specs=pl.BlockSpec((B, out_dim), lambda i: (0, 0)),
        compiler_params=pltpu.CompilerParams(
            dimension_semantics=("arbitrary",)),
    )(x, xw_pack, xb_pack, w_pack, w_out, b_out)


# --------------------------- parameter init --------------------------------
def init_params(key, in_dim, out_dim, n_layers, n_neurons):
    """Deterministic init mimicking PyTorch's default U(-1/sqrt(fan_in), ...).

    Weights are stored pre-transposed to [in_features, out_features].
    Gate order index: 0=Z, 1=G, 2=R, 3=H.
    """
    def uniform(k, shape, fan_in):
        bound = 1.0 / math.sqrt(fan_in)
        return jax.random.uniform(k, shape, jnp.float32, -bound, bound)

    keys = iter(jax.random.split(key, 8 + n_layers * 12))

    w_in = uniform(next(keys), (in_dim, n_neurons), in_dim)
    b_in = uniform(next(keys), (1, n_neurons), in_dim)

    u_layers, w_layers, b_layers = [], [], []
    for _ in range(n_layers):
        u = jnp.stack([uniform(next(keys), (in_dim, n_neurons), in_dim)
                       for _ in range(4)])                      # [4, in_dim, H]
        w = jnp.stack([uniform(next(keys), (n_neurons, n_neurons), n_neurons)
                       for _ in range(4)])                      # [4, H, H]
        b = jnp.stack([uniform(next(keys), (1, n_neurons), n_neurons)
                       for _ in range(4)])                      # [4, 1, H]
        u_layers.append(u)
        w_layers.append(w)
        b_layers.append(b)
    u_all = jnp.stack(u_layers)                                 # [L, 4, in_dim, H]
    w_all = jnp.stack(w_layers)                                 # [L, 4, H, H]
    b_all = jnp.stack(b_layers)                                 # [L, 4, 1, H]

    w_out = uniform(next(keys), (n_neurons, out_dim), n_neurons)
    b_out = uniform(next(keys), (1, out_dim), n_neurons)

    return (w_in, b_in, u_all, w_all, b_all, w_out, b_out)


# --------------------------- pure-JAX reference -----------------------------
def dgm_net_ref(x, params):
    w_in, b_in, u_all, w_all, b_all, w_out, b_out = params
    s = jnp.tanh(x @ w_in + b_in)
    for l in range(u_all.shape[0]):
        z = jnp.tanh(x @ u_all[l, 0] + s @ w_all[l, 0] + b_all[l, 0])
        g = jnp.tanh(x @ u_all[l, 1] + s @ w_all[l, 1] + b_all[l, 1])
        # r gate (index 2) is computed-and-discarded in the PyTorch module;
        # it has no effect on the output, so it is omitted here.
        h = jnp.tanh(x @ u_all[l, 3] + s @ w_all[l, 3] + b_all[l, 3])
        s = (1.0 - g) * h + z * s
    return s @ w_out + b_out


# ---------------------------------- main ------------------------------------
if __name__ == "__main__":
    key = jax.random.PRNGKey(0)
    k_params, k_x = jax.random.split(key)

    params = init_params(k_params, IN_DIM, OUT_DIM, N_LAYERS, N_NEURONS)
    x = jax.random.normal(k_x, (BATCH, IN_DIM), jnp.float32)

    out = dgm_net_pallas(x, params)
    out = jax.block_until_ready(out)

    ref = dgm_net_ref(x, params)
    assert out.shape == (BATCH, OUT_DIM)
    assert jnp.allclose(out, ref, atol=5e-5, rtol=5e-5), "mismatch vs JAX reference"

    print("KERNEL_OK")
</pallas_src>

<mosaic_0001>
module attributes {stable_mosaic.version = 11 : i64} {
  func.func @dgm_kernel(%arg0: i32, %arg1: memref<16x4xf32, #tpu.memory_space<vmem>>, %arg2: memref<4x320xf32, #tpu.memory_space<vmem>>, %arg3: memref<1x320xf32, #tpu.memory_space<vmem>>, %arg4: memref<3x32x96xf32, #tpu.memory_space<vmem>>, %arg5: memref<32x2xf32, #tpu.memory_space<vmem>>, %arg6: memref<1x2xf32, #tpu.memory_space<vmem>>, %arg7: memref<16x2xf32, #tpu.memory_space<vmem>>) attributes {dimension_semantics = [#tpu.dimension_semantics<arbitrary>], iteration_bounds = array<i64: 1>, scalar_prefetch = 0 : i64, scratch_operands = 0 : i64, tpu.core_type = #tpu.core_type<tc>, window_params = [{pipeline_mode = #tpu.pipeline_mode<synchronous>, transform_indices = @transform_0, window_bounds = array<i64: 16, 4>}, {pipeline_mode = #tpu.pipeline_mode<synchronous>, transform_indices = @transform_1, window_bounds = array<i64: 4, 320>}, {pipeline_mode = #tpu.pipeline_mode<synchronous>, transform_indices = @transform_2, window_bounds = array<i64: 1, 320>}, {pipeline_mode = #tpu.pipeline_mode<synchronous>, transform_indices = @transform_3, window_bounds = array<i64: 3, 32, 96>}, {pipeline_mode = #tpu.pipeline_mode<synchronous>, transform_indices = @transform_4, window_bounds = array<i64: 32, 2>}, {pipeline_mode = #tpu.pipeline_mode<synchronous>, transform_indices = @transform_5, window_bounds = array<i64: 1, 2>}, {pipeline_mode = #tpu.pipeline_mode<synchronous>, transform_indices = @transform_6, window_bounds = array<i64: 16, 2>}]} {
    %c0 = arith.constant 0 : index
    %c0_0 = arith.constant 0 : index
    %0 = vector.load %arg1[%c0, %c0_0] : memref<16x4xf32, #tpu.memory_space<vmem>>, vector<16x4xf32>
    %c0_1 = arith.constant 0 : index
    %c0_2 = arith.constant 0 : index
    %1 = vector.load %arg2[%c0_1, %c0_2] : memref<4x320xf32, #tpu.memory_space<vmem>>, vector<4x320xf32>
    %cst = arith.constant dense<0.000000e+00> : vector<16x320xf32>
    %2 = tpu.matmul %0, %1, %cst {dimension_numbers = #tpu.dot_dimension_numbers<[1], [0], [0], [1], [0, 0, 1, 1], [], []>} : vector<16x4xf32>, vector<4x320xf32>, vector<16x320xf32> -> vector<16x320xf32>
    %c0_3 = arith.constant 0 : index
    %c0_4 = arith.constant 0 : index
    %3 = vector.load %arg3[%c0_3, %c0_4] : memref<1x320xf32, #tpu.memory_space<vmem>>, vector<1x320xf32>
    %4 = vector.broadcast %3 : vector<1x320xf32> to vector<16x320xf32>
    %5 = arith.addf %2, %4 : vector<16x320xf32>
    %6 = vector.extract_strided_slice %5 {offsets = [0, 0], sizes = [16, 32], strides = [1, 1]} : vector<16x320xf32> to vector<16x32xf32>
    %7 = math.tanh %6 : vector<16x32xf32>
    %8 = vector.extract_strided_slice %5 {offsets = [0, 32], sizes = [16, 96], strides = [1, 1]} : vector<16x320xf32> to vector<16x96xf32>
    %c0_5 = arith.constant 0 : index
    %c0_6 = arith.constant 0 : index
    %c0_7 = arith.constant 0 : index
    %9 = vector.load %arg4[%c0_5, %c0_6, %c0_7] : memref<3x32x96xf32, #tpu.memory_space<vmem>>, vector<1x32x96xf32>
    %10 = vector.shape_cast %9 : vector<1x32x96xf32> to vector<32x96xf32>
    %cst_8 = arith.constant dense<0.000000e+00> : vector<16x96xf32>
    %11 = tpu.matmul %7, %10, %cst_8 {dimension_numbers = #tpu.dot_dimension_numbers<[1], [0], [0], [1], [0, 0, 1, 1], [], []>} : vector<16x32xf32>, vector<32x96xf32>, vector<16x96xf32> -> vector<16x96xf32>
    %12 = arith.addf %8, %11 : vector<16x96xf32>
    %13 = math.tanh %12 : vector<16x96xf32>
    %14 = vector.extract_strided_slice %13 {offsets = [0, 0], sizes = [16, 32], strides = [1, 1]} : vector<16x96xf32> to vector<16x32xf32>
    %15 = vector.extract_strided_slice %13 {offsets = [0, 32], sizes = [16, 32], strides = [1, 1]} : vector<16x96xf32> to vector<16x32xf32>
    %16 = vector.extract_strided_slice %13 {offsets = [0, 64], sizes = [16, 32], strides = [1, 1]} : vector<16x96xf32> to vector<16x32xf32>
    %cst_9 = arith.constant 1.000000e+00 : f32
    %17 = vector.broadcast %cst_9 : f32 to vector<16x32xf32>
    %18 = arith.subf %17, %15 : vector<16x32xf32>
    %19 = arith.mulf %18, %16 : vector<16x32xf32>
    %20 = arith.mulf %14, %7 : vector<16x32xf32>
    %21 = arith.addf %19, %20 : vector<16x32xf32>
    %22 = vector.extract_strided_slice %5 {offsets = [0, 128], sizes = [16, 96], strides = [1, 1]} : vector<16x320xf32> to vector<16x96xf32>
    %c1 = arith.constant 1 : index
    %c0_10 = arith.constant 0 : index
    %c0_11 = arith.constant 0 : index
    %23 = vector.load %arg4[%c1, %c0_10, %c0_11] : memref<3x32x96xf32, #tpu.memory_space<vmem>>, vector<1x32x96xf32>
    %24 = vector.shape_cast %23 : vector<1x32x96xf32> to vector<32x96xf32>
    %cst_12 = arith.constant dense<0.000000e+00> : vector<16x96xf32>
    %25 = tpu.matmul %21, %24, %cst_12 {dimension_numbers = #tpu.dot_dimension_numbers<[1], [0], [0], [1], [0, 0, 1, 1], [], []>} : vector<16x32xf32>, vector<32x96xf32>, vector<16x96xf32> -> vector<16x96xf32>
    %26 = arith.addf %22, %25 : vector<16x96xf32>
    %27 = math.tanh %26 : vector<16x96xf32>
    %28 = vector.extract_strided_slice %27 {offsets = [0, 0], sizes = [16, 32], strides = [1, 1]} : vector<16x96xf32> to vector<16x32xf32>
    %29 = vector.extract_strided_slice %27 {offsets = [0, 32], sizes = [16, 32], strides = [1, 1]} : vector<16x96xf32> to vector<16x32xf32>
    %30 = vector.extract_strided_slice %27 {offsets = [0, 64], sizes = [16, 32], strides = [1, 1]} : vector<16x96xf32> to vector<16x32xf32>
    %cst_13 = arith.constant 1.000000e+00 : f32
    %31 = vector.broadcast %cst_13 : f32 to vector<16x32xf32>
    %32 = arith.subf %31, %29 : vector<16x32xf32>
    %33 = arith.mulf %32, %30 : vector<16x32xf32>
    %34 = arith.mulf %28, %21 : vector<16x32xf32>
    %35 = arith.addf %33, %34 : vector<16x32xf32>
    %36 = vector.extract_strided_slice %5 {offsets = [0, 224], sizes = [16, 96], strides = [1, 1]} : vector<16x320xf32> to vector<16x96xf32>
    %c2 = arith.constant 2 : index
    %c0_14 = arith.constant 0 : index
    %c0_15 = arith.constant 0 : index
    %37 = vector.load %arg4[%c2, %c0_14, %c0_15] : memref<3x32x96xf32, #tpu.memory_space<vmem>>, vector<1x32x96xf32>
    %38 = vector.shape_cast %37 : vector<1x32x96xf32> to vector<32x96xf32>
    %cst_16 = arith.constant dense<0.000000e+00> : vector<16x96xf32>
    %39 = tpu.matmul %35, %38, %cst_16 {dimension_numbers = #tpu.dot_dimension_numbers<[1], [0], [0], [1], [0, 0, 1, 1], [], []>} : vector<16x32xf32>, vector<32x96xf32>, vector<16x96xf32> -> vector<16x96xf32>
    %40 = arith.addf %36, %39 : vector<16x96xf32>
    %41 = math.tanh %40 : vector<16x96xf32>
    %42 = vector.extract_strided_slice %41 {offsets = [0, 0], sizes = [16, 32], strides = [1, 1]} : vector<16x96xf32> to vector<16x32xf32>
    %43 = vector.extract_strided_slice %41 {offsets = [0, 32], sizes = [16, 32], strides = [1, 1]} : vector<16x96xf32> to vector<16x32xf32>
    %44 = vector.extract_strided_slice %41 {offsets = [0, 64], sizes = [16, 32], strides = [1, 1]} : vector<16x96xf32> to vector<16x32xf32>
    %cst_17 = arith.constant 1.000000e+00 : f32
    %45 = vector.broadcast %cst_17 : f32 to vector<16x32xf32>
    %46 = arith.subf %45, %43 : vector<16x32xf32>
    %47 = arith.mulf %46, %44 : vector<16x32xf32>
    %48 = arith.mulf %42, %35 : vector<16x32xf32>
    %49 = arith.addf %47, %48 : vector<16x32xf32>
    %c0_18 = arith.constant 0 : index
    %c0_19 = arith.constant 0 : index
    %50 = vector.load %arg5[%c0_18, %c0_19] : memref<32x2xf32, #tpu.memory_space<vmem>>, vector<32x2xf32>
    %cst_20 = arith.constant dense<0.000000e+00> : vector<16x2xf32>
    %51 = tpu.matmul %49, %50, %cst_20 {dimension_numbers = #tpu.dot_dimension_numbers<[1], [0], [0], [1], [0, 0, 1, 1], [], []>} : vector<16x32xf32>, vector<32x2xf32>, vector<16x2xf32> -> vector<16x2xf32>
    %c0_21 = arith.constant 0 : index
    %c0_22 = arith.constant 0 : index
    %52 = vector.load %arg6[%c0_21, %c0_22] : memref<1x2xf32, #tpu.memory_space<vmem>>, vector<1x2xf32>
    %53 = vector.broadcast %52 : vector<1x2xf32> to vector<16x2xf32>
    %54 = arith.addf %51, %53 : vector<16x2xf32>
    %c0_23 = arith.constant 0 : index
    %c0_24 = arith.constant 0 : index
    %55 = vector.load %arg7[%c0_23, %c0_24] : memref<16x2xf32, #tpu.memory_space<vmem>>, vector<16x2xf32>
    tpu.vector_store %arg7[%c0_23, %c0_24], %54 {strides = array<i32>} : memref<16x2xf32, #tpu.memory_space<vmem>>, vector<16x2xf32>,
    return
  }
  func.func @transform_0(%arg0: i32) -> (i32, i32) {
    %c0_i32 = arith.constant 0 : i32
    %c0_i32_0 = arith.constant 0 : i32
    %c0_i32_1 = arith.constant 0 : i32
    return %c0_i32, %c0_i32_0 : i32, i32
  }
  func.func @transform_1(%arg0: i32) -> (i32, i32) {
    %c0_i32 = arith.constant 0 : i32
    %c0_i32_0 = arith.constant 0 : i32
    %c0_i32_1 = arith.constant 0 : i32
    return %c0_i32, %c0_i32_0 : i32, i32
  }
  func.func @transform_2(%arg0: i32) -> (i32, i32) {
    %c0_i32 = arith.constant 0 : i32
    %c0_i32_0 = arith.constant 0 : i32
    %c0_i32_1 = arith.constant 0 : i32
    return %c0_i32, %c0_i32_0 : i32, i32
  }
  func.func @transform_3(%arg0: i32) -> (i32, i32, i32) {
    %c0_i32 = arith.constant 0 : i32
    %c0_i32_0 = arith.constant 0 : i32
    %c0_i32_1 = arith.constant 0 : i32
    %c0_i32_2 = arith.constant 0 : i32
    return %c0_i32, %c0_i32_0, %c0_i32_1 : i32, i32, i32
  }
  func.func @transform_4(%arg0: i32) -> (i32, i32) {
    %c0_i32 = arith.constant 0 : i32
    %c0_i32_0 = arith.constant 0 : i32
    %c0_i32_1 = arith.constant 0 : i32
    return %c0_i32, %c0_i32_0 : i32, i32
  }
  func.func @transform_5(%arg0: i32) -> (i32, i32) {
    %c0_i32 = arith.constant 0 : i32
    %c0_i32_0 = arith.constant 0 : i32
    %c0_i32_1 = arith.constant 0 : i32
    return %c0_i32, %c0_i32_0 : i32, i32
  }
  func.func @transform_6(%arg0: i32) -> (i32, i32) {
    %c0_i32 = arith.constant 0 : i32
    %c0_i32_0 = arith.constant 0 : i32
    %c0_i32_1 = arith.constant 0 : i32
    return %c0_i32, %c0_i32_0 : i32, i32
  }
}

</mosaic_0001>

<llo_original>
// kernel: tpu_custom_call.1
$region0: #{tpu_custom_call.1}
  #allocation0 [shape = 'u32[]', space=smem, size = 0x4, offset = 0x4, fixed_abs, tag = 'smem constant byte address 0x4 - core index']
  #allocation1 [shape = 'u32[144,128]{1,0:T(1,128)}', space=vmem, size = 0x12000, scoped, tag = 'internal scratch']
  %s0 = inlined_call_operand.vmem [shape: f32[16,4], index: 0, kind: input, shape index: {}]
  %s1 = inlined_call_operand.vmem [shape: f32[4,320], index: 1, kind: input, shape index: {}]
  %s2 = inlined_call_operand.vmem [shape: f32[1,320], index: 2, kind: input, shape index: {}]
  %s3 = inlined_call_operand.hbm [shape: f32[3,32,96], index: 3, kind: input, shape index: {}]
  %s4 = inlined_call_operand.vmem [shape: f32[32,2], index: 4, kind: input, shape index: {}]
  %s5 = inlined_call_operand.vmem [shape: f32[1,2], index: 5, kind: input, shape index: {}]
  %s6 = inlined_call_operand.vmem [shape: f32[16,2], index: 6, kind: output, shape index: {}]
  %s7 = sld [smem:[#allocation0]]
  $region38: #{tpu_custom_call.1} parent=0
    _
  %s9 = ssub.s32 1, %s7
  %s10 = scalar_select 0, %s9, %s7
  $region1: #{tpu_custom_call.1} parent=0
    #allocation2 [shape = 'u8[49152]{0}', space=vmem, size = 0xc000, scoped, tag = 'input window, operand 3, single buffered']
    #allocation3 [shape = 's32[1]{0}', space=sflag, size = 0x4, scoped, tag = 'scoped memory for tpu_custom_call.1']
    %11 = vsyncpa [#allocation3], 0
    // Predicated region
    $region2: #{tpu_custom_call.1} parent=1 // pred_check
      _
    $region3: #{tpu_custom_call.1} parent=1 // pred_check_branch
      %13 = sbr.rel (0) target = $region5
    $region4: #{tpu_custom_call.1} parent=1 // pred_region
      _
    $region5: #{tpu_custom_call.1} parent=1 // pred_fallthru
      _
    // Predicated region
    $region6: #{tpu_custom_call.1} parent=1 // pred_check
      _
    $region7: #{tpu_custom_call.1} parent=1 // pred_check_branch
      %15 = sbr.rel (0) target = $region9
    $region8: #{tpu_custom_call.1} parent=1 // pred_region
      _
    $region9: #{tpu_custom_call.1} parent=1 // pred_fallthru
      _
    // Predicated region
    $region10: #{tpu_custom_call.1} parent=1 // pred_check
      _
    $region11: #{tpu_custom_call.1} parent=1 // pred_check_branch
      %17 = sbr.rel (0) target = $region13
    $region12: #{tpu_custom_call.1} parent=1 // pred_region
      _
    $region13: #{tpu_custom_call.1} parent=1 // pred_fallthru
      _
    // Predicated region
    $region14: #{tpu_custom_call.1} parent=1 // pred_check
      _
    $region15: #{tpu_custom_call.1} parent=1 // pred_check_branch
      %19 = sbr.rel (0) target = $region17
    $region16: #{tpu_custom_call.1} parent=1 // pred_region
      %s21 = ssub.s32 1536, 1536
      %22 = vsyncadd [#allocation3], %s21
      %s23 = sshll.u32 [#allocation2], 4
      %s24 = int_to_ptr.vmem [resolvable:$true] %s23
      %29 = dma.hbm_to_vmem [thread:$0]  %s3, 1536, %s24, [#allocation3], 128, 128, 8
    $region17: #{tpu_custom_call.1} parent=1 // pred_fallthru
      _
    // Predicated region
    $region18: #{tpu_custom_call.1} parent=1 // pred_check
      _
    $region19: #{tpu_custom_call.1} parent=1 // pred_check_branch
      %31 = sbr.rel (0) target = $region21
    $region20: #{tpu_custom_call.1} parent=1 // pred_region
      _
    $region21: #{tpu_custom_call.1} parent=1 // pred_fallthru
      _
    // Predicated region
    $region22: #{tpu_custom_call.1} parent=1 // pred_check
      _
    $region23: #{tpu_custom_call.1} parent=1 // pred_check_branch
      %33 = sbr.rel (0) target = $region25
    $region24: #{tpu_custom_call.1} parent=1 // pred_region
      _
    $region25: #{tpu_custom_call.1} parent=1 // pred_fallthru
      _
    // Predicated region
    $region26: #{tpu_custom_call.1} parent=1 // pred_check
      _
    $region27: #{tpu_custom_call.1} parent=1 // pred_check_branch
      %35 = sbr.rel (0) target = $region29
    $region28: #{tpu_custom_call.1} parent=1 // pred_region
      %36 = dma.done [#allocation3], 1536
    $region29: #{tpu_custom_call.1} parent=1 // pred_fallthru
      _
    %v37 = vld [vmem:[%s0] sm:$0xff]
    %v38 = vld [vmem:[%s0 + $0x8] sm:$0xff]
    %v39 = vld [vmem:[%s1] sm:$0xff]
    %v40 = vld [vmem:[%s1 + $0x8] sm:$0xf]
    %v41 = vld [vmem:[%s2] sm:$0x7]
    %v43 = vlaneseq
    %v44 = vshrl.u32 %v43, 7
    %v45 = vsub.s32 0, %v44
    %v46 = vrot.slane %v41, %v45
    %v47 = vlaneseq
    %v48 = vshrl.u32 %v47, 7
    %v49 = vsub.s32 1, %v48
    %v50 = vrot.slane %v41, %v49
    %v51 = vlaneseq
    %v52 = vshrl.u32 %v51, 7
    %v53 = vsub.s32 2, %v52
    %v54 = vrot.slane %v41, %v53
    %v60 = vcombine.high %v39, %v39
    %vm61 = vcmask 31744
    %v63 = vsel %vm61, %v37, 0
    %v66 = vsel %vm61, %v38, 0
    %vm68 = vcmask 1043456
    %v69 = vsel %vm68, %v39, 0
    %v71 = vsel %vm68, %v60, 0
    %v73 = vsel %vm68, %v40, 0
    %75 = vmatprep.subr.mxu0 %v71
    %76 = vmatpush1.msra.mxu0 %v69
    %77 = vmatprep.subr.mxu0 0.0
    %78 = vmatpush1.msra.mxu0 0.0
    %79 = vmatprep.subr.mxu0 0.0
    %80 = vmatpush1.msra.mxu0 0.0
    %81 = vmatprep.subr.mxu0 0.0
    %82 = vmatpush1.msra.mxu0 0.0
    %83 = vmatprep.subr.mxu0 0.0
    %84 = vmatpush1.msra.mxu0 0.0
    %85 = vmatprep.subr.mxu0 0.0
    %86 = vmatpush1.msra.mxu0 0.0
    %87 = vmatprep.subr.mxu0 0.0
    %88 = vmatpush1.msra.mxu0 0.0
    %89 = vmatprep.subr.mxu0 0.0
    %90 = vmatpush1.msra.mxu0 0.0
    %91 = vmatprep.subr.mxu0 0.0
    %92 = vmatpush1.msra.mxu0 0.0
    %93 = vmatprep.subr.mxu0 0.0
    %94 = vmatpush1.msra.mxu0 0.0
    %95 = vmatprep.subr.mxu0 0.0
    %96 = vmatpush1.msra.mxu0 0.0
    %97 = vmatprep.subr.mxu0 0.0
    %98 = vmatpush1.msra.mxu0 0.0
    %99 = vmatprep.subr.mxu0 0.0
    %100 = vmatpush1.msra.mxu0 0.0
    %101 = vmatprep.subr.mxu0 0.0
    %102 = vmatpush1.msra.mxu0 0.0
    %103 = vmatprep.subr.mxu0 0.0
    %104 = vmatpush1.msra.mxu0 0.0
    %105 = vmatprep.subr.mxu0 0.0
    %106 = vmatpush1.msra.mxu0 0.0
    %107 = vmatprep.subr.mxu0 0.0
    %108 = vmatpush1.msra.mxu0 0.0
    %109 = vmatprep.subr.mxu0 0.0
    %110 = vmatpush1.msra.mxu0 0.0
    %111 = vmatprep.subr.mxu0 0.0
    %112 = vmatpush1.msra.mxu0 0.0
    %113 = vmatprep.subr.mxu0 0.0
    %114 = vmatpush1.msra.mxu0 0.0
    %115 = vmatprep.subr.mxu0 0.0
    %116 = vmatpush1.msra.mxu0 0.0
    %117 = vmatprep.subr.mxu0 0.0
    %118 = vmatpush1.msra.mxu0 0.0
    %119 = vmatprep.subr.mxu0 0.0
    %120 = vmatpush1.msra.mxu0 0.0
    %121 = vmatprep.subr.mxu0 0.0
    %122 = vmatpush1.msra.mxu0 0.0
    %123 = vmatprep.subr.mxu0 0.0
    %124 = vmatpush1.msra.mxu0 0.0
    %125 = vmatprep.subr.mxu0 0.0
    %126 = vmatpush1.msra.mxu0 0.0
    %127 = vmatprep.subr.mxu0 0.0
    %128 = vmatpush1.msra.mxu0 0.0
    %129 = vmatprep.subr.mxu0 0.0
    %130 = vmatpush1.msra.mxu0 0.0
    %131 = vmatprep.subr.mxu0 0.0
    %132 = vmatpush1.msra.mxu0 0.0
    %133 = vmatprep.subr.mxu0 0.0
    %134 = vmatpush1.msra.mxu0 0.0
    %135 = vmatprep.subr.mxu0 0.0
    %136 = vmatpush1.msra.mxu0 0.0
    %137 = vmatprep.subr.mxu0 0.0
    %138 = vmatpush1.msra.mxu0 0.0
    %139 = vmatprep.mubr.f32.mxu0 0.0
    %140 = vmatmul.mubr.f32.gmra.mrb[0].mxu0 %v63
    %v141 = vpop.f32.mrb[0].mxu0
    %v142 = vadd.f32 %v46, %v141
    %v143 = vpop.f32.mrb[0].mxu0
    %v144 = vadd.f32 %v50, %v143
    %145 = vmatprep.mubr.f32.mxu0 0.0
    %146 = vmatmul.mubr.f32.gmra.mrb[0].mxu0 %v66
    %v147 = vpop.f32.mrb[0].mxu0
    %v148 = vadd.f32 %v46, %v147
    %v149 = vpop.f32.mrb[0].mxu0
    %v150 = vadd.f32 %v50, %v149
    %151 = vdwg.mxu0
    %152 = vmatprep.subr.mxu0 0.0
    %153 = vmatpush1.msra.mxu0 %v73
    %154 = vmatprep.subr.mxu0 0.0
    %155 = vmatpush1.msra.mxu0 0.0
    %156 = vmatprep.subr.mxu0 0.0
    %157 = vmatpush1.msra.mxu0 0.0
    %158 = vmatprep.subr.mxu0 0.0
    %159 = vmatpush1.msra.mxu0 0.0
    %160 = vmatprep.subr.mxu0 0.0
    %161 = vmatpush1.msra.mxu0 0.0
    %162 = vmatprep.subr.mxu0 0.0
    %163 = vmatpush1.msra.mxu0 0.0
    %164 = vmatprep.subr.mxu0 0.0
    %165 = vmatpush1.msra.mxu0 0.0
    %166 = vmatprep.subr.mxu0 0.0
    %167 = vmatpush1.msra.mxu0 0.0
    %168 = vmatprep.subr.mxu0 0.0
    %169 = vmatpush1.msra.mxu0 0.0
    %170 = vmatprep.subr.mxu0 0.0
    %171 = vmatpush1.msra.mxu0 0.0
    %172 = vmatprep.subr.mxu0 0.0
    %173 = vmatpush1.msra.mxu0 0.0
    %174 = vmatprep.subr.mxu0 0.0
    %175 = vmatpush1.msra.mxu0 0.0
    %176 = vmatprep.subr.mxu0 0.0
    %177 = vmatpush1.msra.mxu0 0.0
    %178 = vmatprep.subr.mxu0 0.0
    %179 = vmatpush1.msra.mxu0 0.0
    %180 = vmatprep.subr.mxu0 0.0
    %181 = vmatpush1.msra.mxu0 0.0
    %182 = vmatprep.subr.mxu0 0.0
    %183 = vmatpush1.msra.mxu0 0.0
    %184 = vmatprep.subr.mxu0 0.0
    %185 = vmatpush1.msra.mxu0 0.0
    %186 = vmatprep.subr.mxu0 0.0
    %187 = vmatpush1.msra.mxu0 0.0
    %188 = vmatprep.subr.mxu0 0.0
    %189 = vmatpush1.msra.mxu0 0.0
    %190 = vmatprep.subr.mxu0 0.0
    %191 = vmatpush1.msra.mxu0 0.0
    %192 = vmatprep.subr.mxu0 0.0
    %193 = vmatpush1.msra.mxu0 0.0
    %194 = vmatprep.subr.mxu0 0.0
    %195 = vmatpush1.msra.mxu0 0.0
    %196 = vmatprep.subr.mxu0 0.0
    %197 = vmatpush1.msra.mxu0 0.0
    %198 = vmatprep.subr.mxu0 0.0
    %199 = vmatpush1.msra.mxu0 0.0
    %200 = vmatprep.subr.mxu0 0.0
    %201 = vmatpush1.msra.mxu0 0.0
    %202 = vmatprep.subr.mxu0 0.0
    %203 = vmatpush1.msra.mxu0 0.0
    %204 = vmatprep.subr.mxu0 0.0
    %205 = vmatpush1.msra.mxu0 0.0
    %206 = vmatprep.subr.mxu0 0.0
    %207 = vmatpush1.msra.mxu0 0.0
    %208 = vmatprep.subr.mxu0 0.0
    %209 = vmatpush1.msra.mxu0 0.0
    %210 = vmatprep.subr.mxu0 0.0
    %211 = vmatpush1.msra.mxu0 0.0
    %212 = vmatprep.subr.mxu0 0.0
    %213 = vmatpush1.msra.mxu0 0.0
    %214 = vmatprep.subr.mxu0 0.0
    %215 = vmatpush1.msra.mxu0 0.0
    %216 = vmatprep.mubr.f32.mxu0 0.0
    %217 = vmatmul.mubr.f32.gmra.mrb[0].mxu0 %v63
    %v218 = vpop.f32.mrb[0].mxu0
    %v219 = vadd.f32 %v54, %v218
    %v220 = vpop.f32.mrb[0].mxu0
    %221 = vmatprep.mubr.f32.mxu0 0.0
    %222 = vmatmul.mubr.f32.gmra.mrb[0].mxu0 %v66
    %v223 = vpop.f32.mrb[0].mxu0
    %v224 = vadd.f32 %v54, %v223
    %v225 = vpop.f32.mrb[0].mxu0
    %226 = vdwg.mxu0
    %v227 = vtanh.pop %v142
    %v228 = vtanh.pop %v148
    %v229 = vld [vmem:[#allocation2] sm:$0xff]
    %v230 = vld [vmem:[#allocation2 + $0x8] sm:$0xff]
    %v231 = vld [vmem:[#allocation2 + $0x10] sm:$0xff]
    %v232 = vld [vmem:[#allocation2 + $0x18] sm:$0xff]
    %vm233 = vcmask 261120
    %v235 = vsel %vm233, %v227, 0
    %v238 = vsel %vm233, %v228, 0
    %240 = vmatprep.subr.mxu0 0.0
    %241 = vmatpush1.msra.mxu0 %v229
    %242 = vmatprep.subr.mxu0 0.0
    %243 = vmatpush1.msra.mxu0 %v230
    %244 = vmatprep.subr.mxu0 0.0
    %245 = vmatpush1.msra.mxu0 %v231
    %246 = vmatprep.subr.mxu0 0.0
    %247 = vmatpush1.msra.mxu0 %v232
    %248 = vmatprep.subr.mxu0 0.0
    %249 = vmatpush1.msra.mxu0 0.0
    %250 = vmatprep.subr.mxu0 0.0
    %251 = vmatpush1.msra.mxu0 0.0
    %252 = vmatprep.subr.mxu0 0.0
    %253 = vmatpush1.msra.mxu0 0.0
    %254 = vmatprep.subr.mxu0 0.0
    %255 = vmatpush1.msra.mxu0 0.0
    %256 = vmatprep.subr.mxu0 0.0
    %257 = vmatpush1.msra.mxu0 0.0
    %258 = vmatprep.subr.mxu0 0.0
    %259 = vmatpush1.msra.mxu0 0.0
    %260 = vmatprep.subr.mxu0 0.0
    %261 = vmatpush1.msra.mxu0 0.0
    %262 = vmatprep.subr.mxu0 0.0
    %263 = vmatpush1.msra.mxu0 0.0
    %264 = vmatprep.subr.mxu0 0.0
    %265 = vmatpush1.msra.mxu0 0.0
    %266 = vmatprep.subr.mxu0 0.0
    %267 = vmatpush1.msra.mxu0 0.0
    %268 = vmatprep.subr.mxu0 0.0
    %269 = vmatpush1.msra.mxu0 0.0
    %270 = vmatprep.subr.mxu0 0.0
    %271 = vmatpush1.msra.mxu0 0.0
    %272 = vmatprep.subr.mxu0 0.0
    %273 = vmatpush1.msra.mxu0 0.0
    %274 = vmatprep.subr.mxu0 0.0
    %275 = vmatpush1.msra.mxu0 0.0
    %276 = vmatprep.subr.mxu0 0.0
    %277 = vmatpush1.msra.mxu0 0.0
    %278 = vmatprep.subr.mxu0 0.0
    %279 = vmatpush1.msra.mxu0 0.0
    %280 = vmatprep.subr.mxu0 0.0
    %281 = vmatpush1.msra.mxu0 0.0
    %282 = vmatprep.subr.mxu0 0.0
    %283 = vmatpush1.msra.mxu0 0.0
    %284 = vmatprep.subr.mxu0 0.0
    %285 = vmatpush1.msra.mxu0 0.0
    %286 = vmatprep.subr.mxu0 0.0
    %287 = vmatpush1.msra.mxu0 0.0
    %288 = vmatprep.subr.mxu0 0.0
    %289 = vmatpush1.msra.mxu0 0.0
    %290 = vmatprep.subr.mxu0 0.0
    %291 = vmatpush1.msra.mxu0 0.0
    %292 = vmatprep.subr.mxu0 0.0
    %293 = vmatpush1.msra.mxu0 0.0
    %294 = vmatprep.subr.mxu0 0.0
    %295 = vmatpush1.msra.mxu0 0.0
    %296 = vmatprep.subr.mxu0 0.0
    %297 = vmatpush1.msra.mxu0 0.0
    %298 = vmatprep.subr.mxu0 0.0
    %299 = vmatpush1.msra.mxu0 0.0
    %300 = vmatprep.subr.mxu0 0.0
    %301 = vmatpush1.msra.mxu0 0.0
    %302 = vmatprep.subr.mxu0 0.0
    %303 = vmatpush1.msra.mxu0 0.0
    %304 = vmatprep.mubr.f32.mxu0 0.0
    %305 = vmatmul.mubr.f32.gmra.mrb[0].mxu0 %v235
    %v306 = vpop.f32.mrb[0].mxu0
    %v307 = vadd.f32 0.0, %v306
    %v308 = vpop.f32.mrb[0].mxu0
    %309 = vmatprep.mubr.f32.mxu0 0.0
    %310 = vmatmul.mubr.f32.gmra.mrb[0].mxu0 %v238
    %v311 = vpop.f32.mrb[0].mxu0
    %v312 = vadd.f32 0.0, %v311
    %v313 = vpop.f32.mrb[0].mxu0
    %314 = vdwg.mxu0
    %317 = vrot.lane.b32.xlu0 %v307, 32
    %v318 = vpop.permute.xlu0 %317
    %319 = vrot.lane.b32.xlu0 %v312, 32
    %v320 = vpop.permute.xlu0 %319
    %v323 = vadd.f32 %v142, %v318
    %v324 = vadd.f32 %v148, %v320
    %v325 = vtanh.pop %v323
    %v326 = vtanh.pop %v324
    %v327 = vsub.f32 1.0, %v325
    %v328 = vsub.f32 1.0, %v326
    %331 = vrot.lane.b32.xlu0 %v325, 96
    %v332 = vpop.permute.xlu0 %331
    %333 = vrot.lane.b32.xlu0 %v326, 96
    %v334 = vpop.permute.xlu0 %333
    %v337 = vmul.f32 %v327, %v332
    %v338 = vmul.f32 %v328, %v334
    %339 = vrot.lane.b32.xlu0 %v227, 32
    %v340 = vpop.permute.xlu0 %339
    %341 = vrot.lane.b32.xlu0 %v228, 32
    %v342 = vpop.permute.xlu0 %341
    %v345 = vmul.f32 %v325, %v340
    %v346 = vmul.f32 %v326, %v342
    %349 = vrot.lane.b32.xlu0 %v345, 32
    %v350 = vpop.permute.xlu0 %349
    %351 = vrot.lane.b32.xlu0 %v346, 32
    %v352 = vpop.permute.xlu0 %351
    %v355 = vadd.f32 %v337, %v350
    %v356 = vadd.f32 %v338, %v352
    %s357 = scalar_lea.vmem [#allocation2], 32
    %v358 = vld [vmem:[%s357] sm:$0xff]
    %v359 = vld [vmem:[%s357 + $0x8] sm:$0xff]
    %v360 = vld [vmem:[%s357 + $0x10] sm:$0xff]
    %v361 = vld [vmem:[%s357 + $0x18] sm:$0xff]
    %364 = vrot.lane.b32.xlu0 %v355, 64
    %v365 = vpop.permute.xlu0 %364
    %366 = vrot.lane.b32.xlu0 %v356, 64
    %v367 = vpop.permute.xlu0 %366
    %v368 = vsel %vm233, %v365, 0
    %v370 = vsel %vm233, %v367, 0
    %372 = vmatprep.subr.mxu0 0.0
    %373 = vmatpush1.msra.mxu0 %v358
    %374 = vmatprep.subr.mxu0 0.0
    %375 = vmatpush1.msra.mxu0 %v359
    %376 = vmatprep.subr.mxu0 0.0
    %377 = vmatpush1.msra.mxu0 %v360
    %378 = vmatprep.subr.mxu0 0.0
    %379 = vmatpush1.msra.mxu0 %v361
    %380 = vmatprep.subr.mxu0 0.0
    %381 = vmatpush1.msra.mxu0 0.0
    %382 = vmatprep.subr.mxu0 0.0
    %383 = vmatpush1.msra.mxu0 0.0
    %384 = vmatprep.subr.mxu0 0.0
    %385 = vmatpush1.msra.mxu0 0.0
    %386 = vmatprep.subr.mxu0 0.0
    %387 = vmatpush1.msra.mxu0 0.0
    %388 = vmatprep.subr.mxu0 0.0
    %389 = vmatpush1.msra.mxu0 0.0
    %390 = vmatprep.subr.mxu0 0.0
    %391 = vmatpush1.msra.mxu0 0.0
    %392 = vmatprep.subr.mxu0 0.0
    %393 = vmatpush1.msra.mxu0 0.0
    %394 = vmatprep.subr.mxu0 0.0
    %395 = vmatpush1.msra.mxu0 0.0
    %396 = vmatprep.subr.mxu0 0.0
    %397 = vmatpush1.msra.mxu0 0.0
    %398 = vmatprep.subr.mxu0 0.0
    %399 = vmatpush1.msra.mxu0 0.0
    %400 = vmatprep.subr.mxu0 0.0
    %401 = vmatpush1.msra.mxu0 0.0
    %402 = vmatprep.subr.mxu0 0.0
    %403 = vmatpush1.msra.mxu0 0.0
    %404 = vmatprep.subr.mxu0 0.0
    %405 = vmatpush1.msra.mxu0 0.0
    %406 = vmatprep.subr.mxu0 0.0
    %407 = vmatpush1.msra.mxu0 0.0
    %408 = vmatprep.subr.mxu0 0.0
    %409 = vmatpush1.msra.mxu0 0.0
    %410 = vmatprep.subr.mxu0 0.0
    %411 = vmatpush1.msra.mxu0 0.0
    %412 = vmatprep.subr.mxu0 0.0
    %413 = vmatpush1.msra.mxu0 0.0
    %414 = vmatprep.subr.mxu0 0.0
    %415 = vmatpush1.msra.mxu0 0.0
    %416 = vmatprep.subr.mxu0 0.0
    %417 = vmatpush1.msra.mxu0 0.0
    %418 = vmatprep.subr.mxu0 0.0
    %419 = vmatpush1.msra.mxu0 0.0
    %420 = vmatprep.subr.mxu0 0.0
    %421 = vmatpush1.msra.mxu0 0.0
    %422 = vmatprep.subr.mxu0 0.0
    %423 = vmatpush1.msra.mxu0 0.0
    %424 = vmatprep.subr.mxu0 0.0
    %425 = vmatpush1.msra.mxu0 0.0
    %426 = vmatprep.subr.mxu0 0.0
    %427 = vmatpush1.msra.mxu0 0.0
    %428 = vmatprep.subr.mxu0 0.0
    %429 = vmatpush1.msra.mxu0 0.0
    %430 = vmatprep.subr.mxu0 0.0
    %431 = vmatpush1.msra.mxu0 0.0
    %432 = vmatprep.subr.mxu0 0.0
    %433 = vmatpush1.msra.mxu0 0.0
    %434 = vmatprep.subr.mxu0 0.0
    %435 = vmatpush1.msra.mxu0 0.0
    %436 = vmatprep.mubr.f32.mxu0 0.0
    %437 = vmatmul.mubr.f32.gmra.mrb[0].mxu0 %v368
    %v438 = vpop.f32.mrb[0].mxu0
    %v439 = vadd.f32 0.0, %v438
    %v440 = vpop.f32.mrb[0].mxu0
    %441 = vmatprep.mubr.f32.mxu0 0.0
    %442 = vmatmul.mubr.f32.gmra.mrb[0].mxu0 %v370
    %v443 = vpop.f32.mrb[0].mxu0
    %v444 = vadd.f32 0.0, %v443
    %v445 = vpop.f32.mrb[0].mxu0
    %446 = vdwg.mxu0
    %v447 = vadd.f32 %v144, %v439
    %v448 = vadd.f32 %v150, %v444
    %v449 = vtanh.pop %v447
    %v450 = vtanh.pop %v448
    %v451 = vsub.f32 1.0, %v449
    %v452 = vsub.f32 1.0, %v450
    %455 = vrot.lane.b32.xlu0 %v449, 96
    %v456 = vpop.permute.xlu0 %455
    %457 = vrot.lane.b32.xlu0 %v450, 96
    %v458 = vpop.permute.xlu0 %457
    %v461 = vmul.f32 %v451, %v456
    %v462 = vmul.f32 %v452, %v458
    %v465 = vmul.f32 %v449, %v365
    %v466 = vmul.f32 %v450, %v367
    %469 = vrot.lane.b32.xlu0 %v465, 32
    %v470 = vpop.permute.xlu0 %469
    %471 = vrot.lane.b32.xlu0 %v466, 32
    %v472 = vpop.permute.xlu0 %471
    %v475 = vadd.f32 %v461, %v470
    %v476 = vadd.f32 %v462, %v472
    %s477 = scalar_lea.vmem [#allocation2], 64
    %v478 = vld [vmem:[%s477] sm:$0xff]
    %v479 = vld [vmem:[%s477 + $0x8] sm:$0xff]
    %v480 = vld [vmem:[%s477 + $0x10] sm:$0xff]
    %v481 = vld [vmem:[%s477 + $0x18] sm:$0xff]
    %484 = vrot.lane.b32.xlu0 %v475, 96
    %v485 = vpop.permute.xlu0 %484
    %486 = vrot.lane.b32.xlu0 %v476, 96
    %v487 = vpop.permute.xlu0 %486
    %v488 = vsel %vm233, %v485, 0
    %v490 = vsel %vm233, %v487, 0
    %492 = vmatprep.subr.mxu0 0.0
    %493 = vmatpush1.msra.mxu0 %v478
    %494 = vmatprep.subr.mxu0 0.0
    %495 = vmatpush1.msra.mxu0 %v479
    %496 = vmatprep.subr.mxu0 0.0
    %497 = vmatpush1.msra.mxu0 %v480
    %498 = vmatprep.subr.mxu0 0.0
    %499 = vmatpush1.msra.mxu0 %v481
    %500 = vmatprep.subr.mxu0 0.0
    %501 = vmatpush1.msra.mxu0 0.0
    %502 = vmatprep.subr.mxu0 0.0
    %503 = vmatpush1.msra.mxu0 0.0
    %504 = vmatprep.subr.mxu0 0.0
    %505 = vmatpush1.msra.mxu0 0.0
    %506 = vmatprep.subr.mxu0 0.0
    %507 = vmatpush1.msra.mxu0 0.0
    %508 = vmatprep.subr.mxu0 0.0
    %509 = vmatpush1.msra.mxu0 0.0
    %510 = vmatprep.subr.mxu0 0.0
    %511 = vmatpush1.msra.mxu0 0.0
    %512 = vmatprep.subr.mxu0 0.0
    %513 = vmatpush1.msra.mxu0 0.0
    %514 = vmatprep.subr.mxu0 0.0
    %515 = vmatpush1.msra.mxu0 0.0
    %516 = vmatprep.subr.mxu0 0.0
    %517 = vmatpush1.msra.mxu0 0.0
    %518 = vmatprep.subr.mxu0 0.0
    %519 = vmatpush1.msra.mxu0 0.0
    %520 = vmatprep.subr.mxu0 0.0
    %521 = vmatpush1.msra.mxu0 0.0
    %522 = vmatprep.subr.mxu0 0.0
    %523 = vmatpush1.msra.mxu0 0.0
    %524 = vmatprep.subr.mxu0 0.0
    %525 = vmatpush1.msra.mxu0 0.0
    %526 = vmatprep.subr.mxu0 0.0
    %527 = vmatpush1.msra.mxu0 0.0
    %528 = vmatprep.subr.mxu0 0.0
    %529 = vmatpush1.msra.mxu0 0.0
    %530 = vmatprep.subr.mxu0 0.0
    %531 = vmatpush1.msra.mxu0 0.0
    %532 = vmatprep.subr.mxu0 0.0
    %533 = vmatpush1.msra.mxu0 0.0
    %534 = vmatprep.subr.mxu0 0.0
    %535 = vmatpush1.msra.mxu0 0.0
    %536 = vmatprep.subr.mxu0 0.0
    %537 = vmatpush1.msra.mxu0 0.0
    %538 = vmatprep.subr.mxu0 0.0
    %539 = vmatpush1.msra.mxu0 0.0
    %540 = vmatprep.subr.mxu0 0.0
    %541 = vmatpush1.msra.mxu0 0.0
    %542 = vmatprep.subr.mxu0 0.0
    %543 = vmatpush1.msra.mxu0 0.0
    %544 = vmatprep.subr.mxu0 0.0
    %545 = vmatpush1.msra.mxu0 0.0
    %546 = vmatprep.subr.mxu0 0.0
    %547 = vmatpush1.msra.mxu0 0.0
    %548 = vmatprep.subr.mxu0 0.0
    %549 = vmatpush1.msra.mxu0 0.0
    %550 = vmatprep.subr.mxu0 0.0
    %551 = vmatpush1.msra.mxu0 0.0
    %552 = vmatprep.subr.mxu0 0.0
    %553 = vmatpush1.msra.mxu0 0.0
    %554 = vmatprep.subr.mxu0 0.0
    %555 = vmatpush1.msra.mxu0 0.0
    %556 = vmatprep.mubr.f32.mxu0 0.0
    %557 = vmatmul.mubr.f32.gmra.mrb[0].mxu0 %v488
    %v558 = vpop.f32.mrb[0].mxu0
    %v559 = vadd.f32 0.0, %v558
    %v560 = vpop.f32.mrb[0].mxu0
    %561 = vmatprep.mubr.f32.mxu0 0.0
    %562 = vmatmul.mubr.f32.gmra.mrb[0].mxu0 %v490
    %v563 = vpop.f32.mrb[0].mxu0
    %v564 = vadd.f32 0.0, %v563
    %v565 = vpop.f32.mrb[0].mxu0
    %566 = vdwg.mxu0
    %569 = vrot.lane.b32.xlu0 %v559, 96
    %v570 = vpop.permute.xlu0 %569
    %571 = vrot.lane.b32.xlu0 %v564, 96
    %v572 = vpop.permute.xlu0 %571
    %v575 = vadd.f32 %v144, %v570
    %v576 = vadd.f32 %v219, %v570
    %v577 = vadd.f32 %v150, %v572
    %v578 = vadd.f32 %v224, %v572
    %v579 = vtanh.pop %v575
    %v580 = vtanh.pop %v576
    %v581 = vtanh.pop %v577
    %v582 = vtanh.pop %v578
    %v583 = vsub.f32 1.0, %v580
    %v584 = vsub.f32 1.0, %v582
    %587 = vrot.lane.b32.xlu0 %v580, 96
    %v588 = vpop.permute.xlu0 %587
    %589 = vrot.lane.b32.xlu0 %v582, 96
    %v590 = vpop.permute.xlu0 %589
    %v593 = vmul.f32 %v583, %v588
    %v594 = vmul.f32 %v584, %v590
    %595 = vrot.lane.b32.xlu0 %v475, 64
    %v596 = vpop.permute.xlu0 %595
    %597 = vrot.lane.b32.xlu0 %v476, 64
    %v598 = vpop.permute.xlu0 %597
    %v601 = vmul.f32 %v579, %v596
    %v602 = vmul.f32 %v581, %v598
    %605 = vrot.lane.b32.xlu0 %v601, 32
    %v606 = vpop.permute.xlu0 %605
    %607 = vrot.lane.b32.xlu0 %v602, 32
    %v608 = vpop.permute.xlu0 %607
    %v611 = vadd.f32 %v593, %v606
    %v612 = vadd.f32 %v594, %v608
    %v613 = vld [vmem:[%s4] sm:$0xff]
    %v614 = vld [vmem:[%s4 + $0x8] sm:$0xff]
    %v615 = vld [vmem:[%s4 + $0x10] sm:$0xff]
    %v616 = vld [vmem:[%s4 + $0x18] sm:$0xff]
    %v617 = vld [vmem:[%s5] sm:$0x1]
    %v619 = vlaneseq
    %v620 = vshrl.u32 %v619, 7
    %v621 = vsub.s32 0, %v620
    %v622 = vrot.slane %v617, %v621
    %v625 = vsel %vm233, %v611, 0
    %v628 = vsel %vm233, %v612, 0
    %630 = vmatprep.subr.mxu0 0.0
    %631 = vmatpush1.msra.mxu0 %v613
    %632 = vmatprep.subr.mxu0 0.0
    %633 = vmatpush1.msra.mxu0 %v614
    %634 = vmatprep.subr.mxu0 0.0
    %635 = vmatpush1.msra.mxu0 %v615
    %636 = vmatprep.subr.mxu0 0.0
    %637 = vmatpush1.msra.mxu0 %v616
    %638 = vmatprep.subr.mxu0 0.0
    %639 = vmatpush1.msra.mxu0 0.0
    %640 = vmatprep.subr.mxu0 0.0
    %641 = vmatpush1.msra.mxu0 0.0
    %642 = vmatprep.subr.mxu0 0.0
    %643 = vmatpush1.msra.mxu0 0.0
    %644 = vmatprep.subr.mxu0 0.0
    %645 = vmatpush1.msra.mxu0 0.0
    %646 = vmatprep.subr.mxu0 0.0
    %647 = vmatpush1.msra.mxu0 0.0
    %648 = vmatprep.subr.mxu0 0.0
    %649 = vmatpush1.msra.mxu0 0.0
    %650 = vmatprep.subr.mxu0 0.0
    %651 = vmatpush1.msra.mxu0 0.0
    %652 = vmatprep.subr.mxu0 0.0
    %653 = vmatpush1.msra.mxu0 0.0
    %654 = vmatprep.subr.mxu0 0.0
    %655 = vmatpush1.msra.mxu0 0.0
    %656 = vmatprep.subr.mxu0 0.0
    %657 = vmatpush1.msra.mxu0 0.0
    %658 = vmatprep.subr.mxu0 0.0
    %659 = vmatpush1.msra.mxu0 0.0
    %660 = vmatprep.subr.mxu0 0.0
    %661 = vmatpush1.msra.mxu0 0.0
    %662 = vmatprep.subr.mxu0 0.0
    %663 = vmatpush1.msra.mxu0 0.0
    %664 = vmatprep.subr.mxu0 0.0
    %665 = vmatpush1.msra.mxu0 0.0
    %666 = vmatprep.subr.mxu0 0.0
    %667 = vmatpush1.msra.mxu0 0.0
    %668 = vmatprep.subr.mxu0 0.0
    %669 = vmatpush1.msra.mxu0 0.0
    %670 = vmatprep.subr.mxu0 0.0
    %671 = vmatpush1.msra.mxu0 0.0
    %672 = vmatprep.subr.mxu0 0.0
    %673 = vmatpush1.msra.mxu0 0.0
    %674 = vmatprep.subr.mxu0 0.0
    %675 = vmatpush1.msra.mxu0 0.0
    %676 = vmatprep.subr.mxu0 0.0
    %677 = vmatpush1.msra.mxu0 0.0
    %678 = vmatprep.subr.mxu0 0.0
    %679 = vmatpush1.msra.mxu0 0.0
    %680 = vmatprep.subr.mxu0 0.0
    %681 = vmatpush1.msra.mxu0 0.0
    %682 = vmatprep.subr.mxu0 0.0
    %683 = vmatpush1.msra.mxu0 0.0
    %684 = vmatprep.subr.mxu0 0.0
    %685 = vmatpush1.msra.mxu0 0.0
    %686 = vmatprep.subr.mxu0 0.0
    %687 = vmatpush1.msra.mxu0 0.0
    %688 = vmatprep.subr.mxu0 0.0
    %689 = vmatpush1.msra.mxu0 0.0
    %690 = vmatprep.subr.mxu0 0.0
    %691 = vmatpush1.msra.mxu0 0.0
    %692 = vmatprep.subr.mxu0 0.0
    %693 = vmatpush1.msra.mxu0 0.0
    %694 = vmatprep.mubr.f32.mxu0 0.0
    %695 = vmatmul.mubr.f32.gmra.mrb[0].mxu0 %v625
    %v696 = vpop.f32.mrb[0].mxu0
    %v697 = vadd.f32 %v622, %v696
    %v698 = vpop.f32.mrb[0].mxu0
    %699 = vmatprep.mubr.f32.mxu0 0.0
    %700 = vmatmul.mubr.f32.gmra.mrb[0].mxu0 %v628
    %v701 = vpop.f32.mrb[0].mxu0
    %v702 = vadd.f32 %v622, %v701
    %v703 = vpop.f32.mrb[0].mxu0
    %704 = vdwg.mxu0
    %vm705 = vcmask 15360
    %706 = vst.msk [vmem:[%s6] sm:$0xff] %vm705, %v697
    %707 = vst.msk [vmem:[%s6 + $0x8] sm:$0xff] %vm705, %v702
    // Predicated region
    $region30: #{tpu_custom_call.1} parent=1 // pred_check
      _
    $region31: #{tpu_custom_call.1} parent=1 // pred_check_branch
      %709 = sbr.rel (0) target = $region33
    $region32: #{tpu_custom_call.1} parent=1 // pred_region
      _
    $region33: #{tpu_custom_call.1} parent=1 // pred_fallthru
      _
    // Predicated region
    $region34: #{tpu_custom_call.1} parent=1 // pred_check
      _
    $region35: #{tpu_custom_call.1} parent=1 // pred_check_branch
      %711 = sbr.rel (0) target = $region37
    $region36: #{tpu_custom_call.1} parent=1 // pred_region
      _
    $region37: #{tpu_custom_call.1} parent=1 // pred_fallthru
      _
    %712 = vsyncpa [#allocation3], 1

</llo_original>
